<compile_context>
chip_gen: v5e
topology: v5e:2x2
jax: 0.10.0
libtpu: 0.0.40
codegen_flags: <defaults>
</compile_context>

<pallas_src>
import random
from functools import partial

import jax
import jax.numpy as jnp
from jax.experimental import pallas as pl
from jax.experimental.pallas import tpu as pltpu

LANE = 128          # vreg lane width: last dim must be 128 for unmasked stores
SUBLANE = 8         # f32 sublane granularity
MAX_BLOCK_ROWS = 4096   # 4096 x 128 x f32 = 2 MiB block; x4 live buffers = 8 MiB


def _threshold_kernel(params_ref, x_ref, o_ref):
    # params_ref: SMEM f32[2] = [threshold, value]. Scalar loads ride the
    # scalar slot; compare + select is 2 VPU ops per vreg, so the kernel is
    # purely HBM-bandwidth bound.
    thr = params_ref[0].astype(x_ref.dtype)
    val = params_ref[1].astype(x_ref.dtype)
    x = x_ref[...]
    o_ref[...] = jnp.where(x > thr, x, val)


def _round_up(a, b):
    return -(-a // b) * b


def _threshold_2d(x2d, params, block_rows):
    """x2d: (rows, LANE) slab, rows already a multiple of block_rows (or of 8
    for the single-block path, signalled by block_rows=None)."""
    rows, cols = x2d.shape

    if block_rows is None:
        # Grid-less: whole slab is one VMEM block -> no pipeline overhead.
        return pl.pallas_call(
            _threshold_kernel,
            out_shape=jax.ShapeDtypeStruct(x2d.shape, x2d.dtype),
            in_specs=[
                pl.BlockSpec(memory_space=pltpu.MemorySpace.SMEM),  # [thr, val]
                pl.BlockSpec(memory_space=pltpu.MemorySpace.VMEM),  # x
            ],
            out_specs=pl.BlockSpec(memory_space=pltpu.MemorySpace.VMEM),
            input_output_aliases={1: 0},
        )(params, x2d)

    # Tiled HBM-roofline path: 1-D parallel grid over row blocks.
    grid = (rows // block_rows,)
    return pl.pallas_call(
        _threshold_kernel,
        out_shape=jax.ShapeDtypeStruct(x2d.shape, x2d.dtype),
        grid=grid,
        in_specs=[
            pl.BlockSpec(memory_space=pltpu.MemorySpace.SMEM),       # [thr, val]
            pl.BlockSpec((block_rows, cols), lambda i: (i, 0)),      # x tile
        ],
        out_specs=pl.BlockSpec((block_rows, cols), lambda i: (i, 0)),
        compiler_params=pltpu.CompilerParams(
            dimension_semantics=("parallel",),   # megacore / 2-TC sharding on v7x
        ),
        input_output_aliases={1: 0},
    )(params, x2d)


def _f_threshold_impl(x, params):
    """params: f32[2] device array = [threshold, value]."""
    orig_shape = x.shape
    n = x.size
    flat = x.reshape(-1)

    # Lane-dense layout: pad the flat array so the last dim is exactly 128.
    rows = max(1, _round_up(n, LANE) // LANE)

    if rows <= MAX_BLOCK_ROWS:
        # Single VMEM block (e.g. the 8 KiB test tensor -> (16, 128)).
        block_rows = None
        rows_padded = _round_up(rows, SUBLANE)
    else:
        # Balance blocks across the grid so padding stays < num_blocks*8 rows.
        num_blocks = pl.cdiv(rows, MAX_BLOCK_ROWS)
        block_rows = _round_up(pl.cdiv(rows, num_blocks), SUBLANE)
        rows_padded = block_rows * num_blocks

    n_padded = rows_padded * LANE
    if n_padded != n:
        flat = jnp.pad(flat, (0, n_padded - n))
    x2d = flat.reshape(rows_padded, LANE)

    out2d = _threshold_2d(x2d, params, block_rows)
    return out2d.reshape(-1)[:n].reshape(orig_shape)


# jit the whole wrapper: reshape/pad/slice fuse, params stay device-resident,
# one compile serves any (threshold, value) pair of the same input shape.
f_threshold = jax.jit(_f_threshold_impl)


if __name__ == "__main__":
    # Deterministic "parameters" mirroring FThreshold.__init__ (random.random()).
    random.seed(0)
    threshold = random.random()
    value = threshold + random.random()
    params = jnp.asarray([threshold, value], dtype=jnp.float32)

    key = jax.random.PRNGKey(0)
    x = jax.random.normal(key, (2, 4, 16, 16), dtype=jnp.float32)

    out = jax.block_until_ready(f_threshold(x, params))

    # Reference (same semantics as F.threshold, incl. NaN -> value since NaN
    # fails the > comparison).
    ref = jnp.where(x > jnp.float32(threshold), x, jnp.float32(value))
    assert out.shape == x.shape and out.dtype == x.dtype
    assert bool(jnp.allclose(out, ref)), "mismatch vs reference"

    print("KERNEL_OK")
</pallas_src>

<mosaic_0001>
module attributes {stable_mosaic.version = 11 : i64} {
  func.func @_threshold_kernel(%arg0: memref<2xf32, #tpu.memory_space<smem>>, %arg1: memref<16x128xf32, #tpu.memory_space<vmem>>, %arg2: memref<16x128xf32, #tpu.memory_space<vmem>>) attributes {dimension_semantics = [], scalar_prefetch = 0 : i64, scratch_operands = 0 : i64, tpu.core_type = #tpu.core_type<tc>} {
    %c0 = arith.constant 0 : index
    %0 = memref.load %arg0[%c0] : memref<2xf32, #tpu.memory_space<smem>>
    %c1 = arith.constant 1 : index
    %1 = memref.load %arg0[%c1] : memref<2xf32, #tpu.memory_space<smem>>
    %c0_0 = arith.constant 0 : index
    %c0_1 = arith.constant 0 : index
    %2 = vector.load %arg1[%c0_0, %c0_1] : memref<16x128xf32, #tpu.memory_space<vmem>>, vector<16x128xf32>
    %3 = vector.broadcast %0 : f32 to vector<16x128xf32>
    %4 = arith.cmpf ogt, %2, %3 : vector<16x128xf32>
    %5 = vector.broadcast %1 : f32 to vector<16x128xf32>
    %6 = arith.select %4, %2, %5 : vector<16x128xi1>, vector<16x128xf32>
    %c0_2 = arith.constant 0 : index
    %c0_3 = arith.constant 0 : index
    %7 = vector.load %arg2[%c0_2, %c0_3] : memref<16x128xf32, #tpu.memory_space<vmem>>, vector<16x128xf32>
    tpu.vector_store %arg2[%c0_2, %c0_3], %6 {strides = array<i32>} : memref<16x128xf32, #tpu.memory_space<vmem>>, vector<16x128xf32>,
    return
  }
}

</mosaic_0001>

<llo_original>
// kernel: _f_threshold_impl.1
$region0: #{_f_threshold_impl.1}
  #allocation0 [shape = 'u32[]', space=smem, size = 0x4, offset = 0x4, fixed_abs, tag = 'smem constant byte address 0x4 - core index']
  #allocation1 [shape = 'u32[72,128]{1,0:T(1,128)}', space=vmem, size = 0x9000, scoped, tag = 'internal scratch']
  %s0 = inlined_call_operand.vmem [shape: f32[2], index: 0, kind: input, shape index: {}]
  %s1 = inlined_call_operand.vmem [shape: f32[16,128], index: 1, kind: input, shape index: {}, may-alias: {1,2}]
  %s2 = inlined_call_operand.vmem [shape: f32[16,128], index: 2, kind: output, shape index: {}, may-alias: {1,2}]
  %s3 = sld [smem:[#allocation0]]
  $region22: #{_f_threshold_impl.1} parent=0
    _
  %s5 = ssub.s32 1, %s3
  %s6 = scalar_select 0, %s5, %s3
  $region1: #{_f_threshold_impl.1} parent=0
    #allocation2 [shape = 'u8[512]{0}', space=smem, size = 0x200, scoped, tag = 'input window, operand 0, single buffered']
    #allocation3 [shape = 's32[1]{0}', space=sflag, size = 0x4, scoped, tag = 'scoped memory for _f_threshold_impl.1']
    %7 = vsyncpa [#allocation3], 0
    // Predicated region
    $region2: #{_f_threshold_impl.1} parent=1 // pred_check
      _
    $region3: #{_f_threshold_impl.1} parent=1 // pred_check_branch
      %9 = sbr.rel (0) target = $region5
    $region4: #{_f_threshold_impl.1} parent=1 // pred_region
      %11 = vsyncadd [#allocation3], 0
      %s13 = sshll.u32 %s0, 4
      %s14 = int_to_ptr.vmem [resolvable:$true] %s13
      %16 = dma.vmem_to_smem %s14, 16, [#allocation2], [#allocation3]
    $region5: #{_f_threshold_impl.1} parent=1 // pred_fallthru
      _
    // Predicated region
    $region6: #{_f_threshold_impl.1} parent=1 // pred_check
      _
    $region7: #{_f_threshold_impl.1} parent=1 // pred_check_branch
      %18 = sbr.rel (0) target = $region9
    $region8: #{_f_threshold_impl.1} parent=1 // pred_region
      _
    $region9: #{_f_threshold_impl.1} parent=1 // pred_fallthru
      _
    // Predicated region
    $region10: #{_f_threshold_impl.1} parent=1 // pred_check
      _
    $region11: #{_f_threshold_impl.1} parent=1 // pred_check_branch
      %20 = sbr.rel (0) target = $region13
    $region12: #{_f_threshold_impl.1} parent=1 // pred_region
      %22 = dma.done [#allocation3], 16
    $region13: #{_f_threshold_impl.1} parent=1 // pred_fallthru
      _
    %23 = sfence
    %s24 = sld [smem:[#allocation2]]
    %s25 = sld [smem:[#allocation2 + $0x1]]
    %v26 = vld [vmem:[%s1] sm:$0xff]
    %v27 = vld [vmem:[%s1 + $0x8] sm:$0xff]
    %v28 = vstv %s24
    %vm29 = vcmp.gt.f32.partialorder %v26, %v28
    %vm30 = vcmp.gt.f32.partialorder %v27, %v28
    %v31 = vstv %s25
    %v32 = vsel %vm29, %v26, %v31
    %v33 = vsel %vm30, %v27, %v31
    %34 = vst [vmem:[%s2] sm:$0xff] %v32
    %35 = vst [vmem:[%s2 + $0x8] sm:$0xff] %v33
    // Predicated region
    $region14: #{_f_threshold_impl.1} parent=1 // pred_check
      _
    $region15: #{_f_threshold_impl.1} parent=1 // pred_check_branch
      %37 = sbr.rel (0) target = $region17
    $region16: #{_f_threshold_impl.1} parent=1 // pred_region
      _
    $region17: #{_f_threshold_impl.1} parent=1 // pred_fallthru
      _
    // Predicated region
    $region18: #{_f_threshold_impl.1} parent=1 // pred_check
      _
    $region19: #{_f_threshold_impl.1} parent=1 // pred_check_branch
      %39 = sbr.rel (0) target = $region21
    $region20: #{_f_threshold_impl.1} parent=1 // pred_region
      _
    $region21: #{_f_threshold_impl.1} parent=1 // pred_fallthru
      _
    %40 = vsyncpa [#allocation3], 1

</llo_original>
